<compile_context>
chip_gen: v5e
topology: v5e:2x2
jax: 0.10.0
libtpu: 0.0.40
codegen_flags: <defaults>
</compile_context>

<pallas_src>
import functools

import jax
import jax.numpy as jnp
from jax.experimental import pallas as pl
from jax.experimental.pallas import tpu as pltpu


def _round_up(x, m):
    return ((x + m - 1) // m) * m


def _graph_sim_kernel(g1_ref, g2_ref, w01a_ref, w01b_ref, b01_ref,
                      w2_ref, b2_ref, ws_ref, bs_ref, out_ref):
    # Activations may arrive as bf16 (optional streaming mode); math stays f32.
    g1 = g1_ref[...].astype(jnp.float32)
    g2 = g2_ref[...].astype(jnp.float32)

    # Fused L0+L1 split across the two input streams (no concat required):
    #   [g1 | g2] @ W01 + b01  ==  g1 @ W01[:E] + g2 @ W01[E:] + b01
    h = (jnp.dot(g1, w01a_ref[...], preferred_element_type=jnp.float32)
         + jnp.dot(g2, w01b_ref[...], preferred_element_type=jnp.float32)
         + b01_ref[...])
    h = jnp.maximum(h, 0.0)

    # L2: Linear(s0 -> s1) + ReLU
    h = jnp.dot(h, w2_ref[...], preferred_element_type=jnp.float32) + b2_ref[...]
    h = jnp.maximum(h, 0.0)

    # Similarity head + sigmoid epilogue kept on the EUP:
    #   sigmoid(x) = 1 / (1 + exp(-x)); exp and approx-reciprocal both run on
    #   the EUP slot, keeping the post-matmul VPU chain minimal.
    logits = jnp.dot(h, ws_ref[...], preferred_element_type=jnp.float32) + bs_ref[...]
    out_ref[...] = pl.reciprocal(1.0 + jnp.exp(-logits), approx=True)


def fuse_params(params):
    """Fold the activation-free L0 into L1 once, outside the per-call path.

    W01 = W0 @ W1, b01 = b0 @ W1 + b1; split W01 into the g1/g2 halves so the
    kernel never needs a concatenated activation stream."""
    w01 = params["w0"] @ params["w1"]                      # (2E, s0)
    b01 = params["b0"] @ params["w1"] + params["b1"]       # (1, s0)
    E = params["w0"].shape[0] // 2
    return {
        "w01a": jnp.asarray(w01[:E], jnp.float32),         # (E, s0)
        "w01b": jnp.asarray(w01[E:], jnp.float32),         # (E, s0)
        "b01": jnp.asarray(b01, jnp.float32),
        "w2": jnp.asarray(params["w2"], jnp.float32),
        "b2": jnp.asarray(params["b2"], jnp.float32),
        "ws": jnp.asarray(params["ws"], jnp.float32),
        "bs": jnp.asarray(params["bs"], jnp.float32),
    }


@functools.partial(jax.jit, static_argnames=("max_tile", "activations_bf16"))
def graph_similarity_forward(h_g1, h_g2, fused, *, max_tile=8192,
                             activations_bf16=False):
    """Pallas implementation of GraphSimilarity.forward (takes fused params)."""
    if h_g1.ndim == 1:
        h_g1 = h_g1.reshape(1, -1)
    if h_g2.ndim == 1:
        h_g2 = h_g2.reshape(1, -1)

    act_dtype = jnp.bfloat16 if activations_bf16 else jnp.float32
    h_g1 = h_g1.astype(act_dtype)
    h_g2 = h_g2.astype(act_dtype)

    B, E = h_g1.shape
    num_properties = fused["bs"].shape[-1]

    # Batch tile: whole batch in one block when it fits (full-dim block shape
    # is always legal); otherwise a large sublane-aligned tile with a cdiv
    # grid.  The ragged last block is handled by the pipeline's masked
    # boundary reads/writes -- no jnp.pad copy, no trailing slice.
    tile_cap = max(8, (max_tile // 8) * 8)
    if B <= tile_cap:
        TB = B
        grid = (1,)
    else:
        TB = tile_cap
        grid = (pl.cdiv(B, TB),)

    # VMEM budget: two lane-padded (TB,128) input blocks + one output block,
    # double-buffered, plus resident weights/slack.  Cap below v7x's 64 MiB
    # physical VMEM; the explicit limit also covers v5e's 16 MiB scoped default.
    act_bytes = 2 if activations_bf16 else 4
    per_step = 2 * TB * 128 * act_bytes + TB * 128 * 4
    vmem_limit = int(min(60 * 1024 * 1024,
                         max(32 * 1024 * 1024, 2 * per_step + (2 << 20))))

    def resident(arr):
        # Full-array block, same block index every grid step -> stays in VMEM.
        return pl.BlockSpec(arr.shape, lambda i: (0, 0))

    out = pl.pallas_call(
        _graph_sim_kernel,
        out_shape=jax.ShapeDtypeStruct((B, num_properties), jnp.float32),
        grid=grid,
        in_specs=[
            pl.BlockSpec((TB, E), lambda i: (i, 0)),   # h_g1 (pipelined)
            pl.BlockSpec((TB, E), lambda i: (i, 0)),   # h_g2 (pipelined)
            resident(fused["w01a"]), resident(fused["w01b"]),
            resident(fused["b01"]),
            resident(fused["w2"]), resident(fused["b2"]),
            resident(fused["ws"]), resident(fused["bs"]),
        ],
        out_specs=pl.BlockSpec((TB, num_properties), lambda i: (i, 0)),
        compiler_params=pltpu.CompilerParams(
            dimension_semantics=("parallel",),
            vmem_limit_bytes=vmem_limit),
    )(h_g1, h_g2, fused["w01a"], fused["w01b"], fused["b01"],
      fused["w2"], fused["b2"], fused["ws"], fused["bs"])
    return out


def init_params(key, embedding_space, size_layers=(7, 7), num_properties=12):
    """Deterministic PyTorch-Linear-style init (uniform in +/- 1/sqrt(fan_in)).

    Weights stored as (in_features, out_features)."""
    def linear(key, fan_in, fan_out):
        kw, kb = jax.random.split(key)
        bound = 1.0 / jnp.sqrt(fan_in)
        w = jax.random.uniform(kw, (fan_in, fan_out), jnp.float32, -bound, bound)
        b = jax.random.uniform(kb, (1, fan_out), jnp.float32, -bound, bound)
        return w, b

    k0, k1, k2, ks = jax.random.split(key, 4)
    s0, s1 = size_layers
    w0, b0 = linear(k0, 2 * embedding_space, s0)   # Linear(2E, s0)
    w1, b1 = linear(k1, s0, s0)                    # Linear(s0, s0)
    w2, b2 = linear(k2, s0, s1)                    # Linear(s0, s1)
    ws, bs = linear(ks, s1, num_properties)        # Linear(s1, 12)
    return {
        "w0": w0, "b0": b0,
        "w1": w1, "b1": b1,
        "w2": w2, "b2": b2,
        "ws": ws, "bs": bs,
    }


def _reference_forward(h_g1, h_g2, params):
    """Plain-JAX reference of the PyTorch forward (unfolded) for sanity checking."""
    if h_g1.ndim == 1:
        h_g1 = h_g1.reshape(1, -1)
    if h_g2.ndim == 1:
        h_g2 = h_g2.reshape(1, -1)
    h = jnp.concatenate([h_g1, h_g2], axis=1)
    h = h @ params["w0"] + params["b0"]
    h = jnp.maximum(h @ params["w1"] + params["b1"], 0.0)
    h = jnp.maximum(h @ params["w2"] + params["b2"], 0.0)
    logits = h @ params["ws"] + params["bs"]
    return jax.nn.sigmoid(logits)


# TODO(synk): get_true_similarity (networkx graph-property extraction) is host-side
# preprocessing with no Pallas equivalent; only the forward pass is implemented.


if __name__ == "__main__":
    EMBEDDING_SPACE = 32
    SIZE_LAYERS = (7, 7)
    NUM_PROPERTIES = 12
    # Tolerance covers L0/L1 fold re-rounding and the approx-reciprocal sigmoid.
    ATOL = RTOL = 5e-3

    key = jax.random.PRNGKey(0)
    k_params, k1, k2, k3, k4 = jax.random.split(key, 5)
    params = init_params(k_params, EMBEDDING_SPACE, SIZE_LAYERS, NUM_PROPERTIES)
    fused = fuse_params(params)          # hoisted out of the per-call path

    # Case 1: small batch (single full-array block, grid of 1).
    B1 = 8
    h_g1 = jax.random.normal(k1, (B1, EMBEDDING_SPACE), jnp.float32)
    h_g2 = jax.random.normal(k2, (B1, EMBEDDING_SPACE), jnp.float32)
    out = jax.block_until_ready(graph_similarity_forward(h_g1, h_g2, fused))
    ref = _reference_forward(h_g1, h_g2, params)
    assert out.shape == (B1, NUM_PROPERTIES), out.shape
    assert jnp.allclose(out, ref, atol=ATOL, rtol=RTOL), "mismatch vs reference (B=8)"

    # Case 2: non-divisible batch exercising the cdiv grid + ragged last block
    # (no jnp.pad, no trailing slice).
    B2 = 40
    h_g1b = jax.random.normal(k3, (B2, EMBEDDING_SPACE), jnp.float32)
    h_g2b = jax.random.normal(k4, (B2, EMBEDDING_SPACE), jnp.float32)
    out2 = jax.block_until_ready(
        graph_similarity_forward(h_g1b, h_g2b, fused, max_tile=16))
    ref2 = _reference_forward(h_g1b, h_g2b, params)
    assert out2.shape == (B2, NUM_PROPERTIES), out2.shape
    assert jnp.allclose(out2, ref2, atol=ATOL, rtol=RTOL), "mismatch vs reference (B=40)"

    # Case 3: multi-step grid that divides evenly (no ragged block).
    B3 = 64
    h_g1c = jax.random.normal(k3, (B3, EMBEDDING_SPACE), jnp.float32)
    h_g2c = jax.random.normal(k4, (B3, EMBEDDING_SPACE), jnp.float32)
    out3 = jax.block_until_ready(
        graph_similarity_forward(h_g1c, h_g2c, fused, max_tile=16))
    ref3 = _reference_forward(h_g1c, h_g2c, params)
    assert out3.shape == (B3, NUM_PROPERTIES), out3.shape
    assert jnp.allclose(out3, ref3, atol=ATOL, rtol=RTOL), "mismatch vs reference (B=64)"

    print("KERNEL_OK")
</pallas_src>

<mosaic_0001>
module attributes {stable_mosaic.version = 11 : i64} {
  func.func @_graph_sim_kernel(%arg0: i32, %arg1: memref<8x32xf32, #tpu.memory_space<vmem>>, %arg2: memref<8x32xf32, #tpu.memory_space<vmem>>, %arg3: memref<32x7xf32, #tpu.memory_space<vmem>>, %arg4: memref<32x7xf32, #tpu.memory_space<vmem>>, %arg5: memref<1x7xf32, #tpu.memory_space<vmem>>, %arg6: memref<7x7xf32, #tpu.memory_space<vmem>>, %arg7: memref<1x7xf32, #tpu.memory_space<vmem>>, %arg8: memref<7x12xf32, #tpu.memory_space<vmem>>, %arg9: memref<1x12xf32, #tpu.memory_space<vmem>>, %arg10: memref<8x12xf32, #tpu.memory_space<vmem>>) attributes {dimension_semantics = [#tpu.dimension_semantics<parallel>], iteration_bounds = array<i64: 1>, scalar_prefetch = 0 : i64, scratch_operands = 0 : i64, tpu.core_type = #tpu.core_type<tc>, window_params = [{transform_indices = @transform_0, window_bounds = array<i64: 8, 32>}, {transform_indices = @transform_1, window_bounds = array<i64: 8, 32>}, {pipeline_mode = #tpu.pipeline_mode<synchronous>, transform_indices = @transform_2, window_bounds = array<i64: 32, 7>}, {pipeline_mode = #tpu.pipeline_mode<synchronous>, transform_indices = @transform_3, window_bounds = array<i64: 32, 7>}, {pipeline_mode = #tpu.pipeline_mode<synchronous>, transform_indices = @transform_4, window_bounds = array<i64: 1, 7>}, {pipeline_mode = #tpu.pipeline_mode<synchronous>, transform_indices = @transform_5, window_bounds = array<i64: 7, 7>}, {pipeline_mode = #tpu.pipeline_mode<synchronous>, transform_indices = @transform_6, window_bounds = array<i64: 1, 7>}, {pipeline_mode = #tpu.pipeline_mode<synchronous>, transform_indices = @transform_7, window_bounds = array<i64: 7, 12>}, {pipeline_mode = #tpu.pipeline_mode<synchronous>, transform_indices = @transform_8, window_bounds = array<i64: 1, 12>}, {transform_indices = @transform_9, window_bounds = array<i64: 8, 12>}]} {
    %c0 = arith.constant 0 : index
    %c0_0 = arith.constant 0 : index
    %0 = vector.load %arg1[%c0, %c0_0] : memref<8x32xf32, #tpu.memory_space<vmem>>, vector<8x32xf32>
    %c0_1 = arith.constant 0 : index
    %c0_2 = arith.constant 0 : index
    %1 = vector.load %arg2[%c0_1, %c0_2] : memref<8x32xf32, #tpu.memory_space<vmem>>, vector<8x32xf32>
    %c0_3 = arith.constant 0 : index
    %c0_4 = arith.constant 0 : index
    %2 = vector.load %arg3[%c0_3, %c0_4] : memref<32x7xf32, #tpu.memory_space<vmem>>, vector<32x7xf32>
    %cst = arith.constant dense<0.000000e+00> : vector<8x7xf32>
    %3 = tpu.matmul %0, %2, %cst {dimension_numbers = #tpu.dot_dimension_numbers<[1], [0], [0], [1], [0, 0, 1, 1], [], []>} : vector<8x32xf32>, vector<32x7xf32>, vector<8x7xf32> -> vector<8x7xf32>
    %c0_5 = arith.constant 0 : index
    %c0_6 = arith.constant 0 : index
    %4 = vector.load %arg4[%c0_5, %c0_6] : memref<32x7xf32, #tpu.memory_space<vmem>>, vector<32x7xf32>
    %cst_7 = arith.constant dense<0.000000e+00> : vector<8x7xf32>
    %5 = tpu.matmul %1, %4, %cst_7 {dimension_numbers = #tpu.dot_dimension_numbers<[1], [0], [0], [1], [0, 0, 1, 1], [], []>} : vector<8x32xf32>, vector<32x7xf32>, vector<8x7xf32> -> vector<8x7xf32>
    %6 = arith.addf %3, %5 : vector<8x7xf32>
    %c0_8 = arith.constant 0 : index
    %c0_9 = arith.constant 0 : index
    %7 = vector.load %arg5[%c0_8, %c0_9] : memref<1x7xf32, #tpu.memory_space<vmem>>, vector<1x7xf32>
    %8 = vector.broadcast %7 : vector<1x7xf32> to vector<8x7xf32>
    %9 = arith.addf %6, %8 : vector<8x7xf32>
    %cst_10 = arith.constant 0.000000e+00 : f32
    %10 = vector.broadcast %cst_10 : f32 to vector<8x7xf32>
    %11 = arith.maximumf %9, %10 : vector<8x7xf32>
    %c0_11 = arith.constant 0 : index
    %c0_12 = arith.constant 0 : index
    %12 = vector.load %arg6[%c0_11, %c0_12] : memref<7x7xf32, #tpu.memory_space<vmem>>, vector<7x7xf32>
    %cst_13 = arith.constant dense<0.000000e+00> : vector<8x7xf32>
    %13 = tpu.matmul %11, %12, %cst_13 {dimension_numbers = #tpu.dot_dimension_numbers<[1], [0], [0], [1], [0, 0, 1, 1], [], []>} : vector<8x7xf32>, vector<7x7xf32>, vector<8x7xf32> -> vector<8x7xf32>
    %c0_14 = arith.constant 0 : index
    %c0_15 = arith.constant 0 : index
    %14 = vector.load %arg7[%c0_14, %c0_15] : memref<1x7xf32, #tpu.memory_space<vmem>>, vector<1x7xf32>
    %15 = vector.broadcast %14 : vector<1x7xf32> to vector<8x7xf32>
    %16 = arith.addf %13, %15 : vector<8x7xf32>
    %cst_16 = arith.constant 0.000000e+00 : f32
    %17 = vector.broadcast %cst_16 : f32 to vector<8x7xf32>
    %18 = arith.maximumf %16, %17 : vector<8x7xf32>
    %c0_17 = arith.constant 0 : index
    %c0_18 = arith.constant 0 : index
    %19 = vector.load %arg8[%c0_17, %c0_18] : memref<7x12xf32, #tpu.memory_space<vmem>>, vector<7x12xf32>
    %cst_19 = arith.constant dense<0.000000e+00> : vector<8x12xf32>
    %20 = tpu.matmul %18, %19, %cst_19 {dimension_numbers = #tpu.dot_dimension_numbers<[1], [0], [0], [1], [0, 0, 1, 1], [], []>} : vector<8x7xf32>, vector<7x12xf32>, vector<8x12xf32> -> vector<8x12xf32>
    %c0_20 = arith.constant 0 : index
    %c0_21 = arith.constant 0 : index
    %21 = vector.load %arg9[%c0_20, %c0_21] : memref<1x12xf32, #tpu.memory_space<vmem>>, vector<1x12xf32>
    %22 = vector.broadcast %21 : vector<1x12xf32> to vector<8x12xf32>
    %23 = arith.addf %20, %22 : vector<8x12xf32>
    %cst_22 = arith.constant 0.000000e+00 : f32
    %24 = vector.broadcast %cst_22 : f32 to vector<8x12xf32>
    %25 = arith.subf %24, %23 : vector<8x12xf32>
    %26 = math.exp %25 : vector<8x12xf32>
    %cst_23 = arith.constant 1.000000e+00 : f32
    %27 = vector.broadcast %cst_23 : f32 to vector<8x12xf32>
    %28 = arith.addf %27, %26 : vector<8x12xf32>
    %29 = tpu.reciprocal %28 {approx = true} : vector<8x12xf32> -> vector<8x12xf32>
    %c0_24 = arith.constant 0 : index
    %c0_25 = arith.constant 0 : index
    %30 = vector.load %arg10[%c0_24, %c0_25] : memref<8x12xf32, #tpu.memory_space<vmem>>, vector<8x12xf32>
    tpu.vector_store %arg10[%c0_24, %c0_25], %29 {strides = array<i32>} : memref<8x12xf32, #tpu.memory_space<vmem>>, vector<8x12xf32>,
    return
  }
  func.func @transform_0(%arg0: i32) -> (i32, i32) {
    %c0_i32 = arith.constant 0 : i32
    %c0_i32_0 = arith.constant 0 : i32
    return %arg0, %c0_i32 : i32, i32
  }
  func.func @transform_1(%arg0: i32) -> (i32, i32) {
    %c0_i32 = arith.constant 0 : i32
    %c0_i32_0 = arith.constant 0 : i32
    return %arg0, %c0_i32 : i32, i32
  }
  func.func @transform_2(%arg0: i32) -> (i32, i32) {
    %c0_i32 = arith.constant 0 : i32
    %c0_i32_0 = arith.constant 0 : i32
    %c0_i32_1 = arith.constant 0 : i32
    return %c0_i32, %c0_i32_0 : i32, i32
  }
  func.func @transform_3(%arg0: i32) -> (i32, i32) {
    %c0_i32 = arith.constant 0 : i32
    %c0_i32_0 = arith.constant 0 : i32
    %c0_i32_1 = arith.constant 0 : i32
    return %c0_i32, %c0_i32_0 : i32, i32
  }
  func.func @transform_4(%arg0: i32) -> (i32, i32) {
    %c0_i32 = arith.constant 0 : i32
    %c0_i32_0 = arith.constant 0 : i32
    %c0_i32_1 = arith.constant 0 : i32
    return %c0_i32, %c0_i32_0 : i32, i32
  }
  func.func @transform_5(%arg0: i32) -> (i32, i32) {
    %c0_i32 = arith.constant 0 : i32
    %c0_i32_0 = arith.constant 0 : i32
    %c0_i32_1 = arith.constant 0 : i32
    return %c0_i32, %c0_i32_0 : i32, i32
  }
  func.func @transform_6(%arg0: i32) -> (i32, i32) {
    %c0_i32 = arith.constant 0 : i32
    %c0_i32_0 = arith.constant 0 : i32
    %c0_i32_1 = arith.constant 0 : i32
    return %c0_i32, %c0_i32_0 : i32, i32
  }
  func.func @transform_7(%arg0: i32) -> (i32, i32) {
    %c0_i32 = arith.constant 0 : i32
    %c0_i32_0 = arith.constant 0 : i32
    %c0_i32_1 = arith.constant 0 : i32
    return %c0_i32, %c0_i32_0 : i32, i32
  }
  func.func @transform_8(%arg0: i32) -> (i32, i32) {
    %c0_i32 = arith.constant 0 : i32
    %c0_i32_0 = arith.constant 0 : i32
    %c0_i32_1 = arith.constant 0 : i32
    return %c0_i32, %c0_i32_0 : i32, i32
  }
  func.func @transform_9(%arg0: i32) -> (i32, i32) {
    %c0_i32 = arith.constant 0 : i32
    %c0_i32_0 = arith.constant 0 : i32
    return %arg0, %c0_i32 : i32, i32
  }
}

</mosaic_0001>

<llo_original>
// kernel: graph_similarity_forward.1
$region0: #{graph_similarity_forward.1}
  #allocation0 [shape = 'u32[]', space=smem, size = 0x4, offset = 0x4, fixed_abs, tag = 'smem constant byte address 0x4 - core index']
  #allocation1 [shape = 'u32[72,128]{1,0:T(1,128)}', space=vmem, size = 0x9000, scoped, tag = 'internal scratch']
  %s0 = inlined_call_operand.vmem [shape: f32[8,32], index: 0, kind: input, shape index: {}]
  %s1 = inlined_call_operand.vmem [shape: f32[8,32], index: 1, kind: input, shape index: {}]
  %s2 = inlined_call_operand.vmem [shape: f32[32,7], index: 2, kind: input, shape index: {}]
  %s3 = inlined_call_operand.vmem [shape: f32[32,7], index: 3, kind: input, shape index: {}]
  %s4 = inlined_call_operand.vmem [shape: f32[1,7], index: 4, kind: input, shape index: {}]
  %s5 = inlined_call_operand.vmem [shape: f32[7,7], index: 5, kind: input, shape index: {}]
  %s6 = inlined_call_operand.vmem [shape: f32[1,7], index: 6, kind: input, shape index: {}]
  %s7 = inlined_call_operand.vmem [shape: f32[7,12], index: 7, kind: input, shape index: {}]
  %s8 = inlined_call_operand.vmem [shape: f32[1,12], index: 8, kind: input, shape index: {}]
  %s9 = inlined_call_operand.hbm [shape: f32[8,12], index: 9, kind: output, shape index: {}]
  %s10 = sld [smem:[#allocation0]]
  $region46: #{graph_similarity_forward.1} parent=0
    _
  %s12 = ssub.s32 1, %s10
  %s13 = scalar_select 0, %s12, %s10
  $region1: #{graph_similarity_forward.1} parent=0
    #allocation2 [shape = 'u8[4096]{0}', space=vmem, size = 0x1000, scoped, tag = 'output window, operand 0, single buffered']
    #allocation3 [shape = 's32[1]{0}', space=sflag, size = 0x4, scoped, tag = 'scoped memory for graph_similarity_forward.1']
    %14 = vsyncpa [#allocation3], 0
    // Predicated region
    $region2: #{graph_similarity_forward.1} parent=1 // pred_check
      _
    $region3: #{graph_similarity_forward.1} parent=1 // pred_check_branch
      %16 = sbr.rel (0) target = $region5
    $region4: #{graph_similarity_forward.1} parent=1 // pred_region
      _
    $region5: #{graph_similarity_forward.1} parent=1 // pred_fallthru
      _
    // Predicated region
    $region6: #{graph_similarity_forward.1} parent=1 // pred_check
      _
    $region7: #{graph_similarity_forward.1} parent=1 // pred_check_branch
      %18 = sbr.rel (0) target = $region9
    $region8: #{graph_similarity_forward.1} parent=1 // pred_region
      _
    $region9: #{graph_similarity_forward.1} parent=1 // pred_fallthru
      _
    // Predicated region
    $region10: #{graph_similarity_forward.1} parent=1 // pred_check
      _
    $region11: #{graph_similarity_forward.1} parent=1 // pred_check_branch
      %20 = sbr.rel (0) target = $region13
    $region12: #{graph_similarity_forward.1} parent=1 // pred_region
      _
    $region13: #{graph_similarity_forward.1} parent=1 // pred_fallthru
      _
    // Predicated region
    $region14: #{graph_similarity_forward.1} parent=1 // pred_check
      _
    $region15: #{graph_similarity_forward.1} parent=1 // pred_check_branch
      %22 = sbr.rel (0) target = $region17
    $region16: #{graph_similarity_forward.1} parent=1 // pred_region
      _
    $region17: #{graph_similarity_forward.1} parent=1 // pred_fallthru
      _
    // Predicated region
    $region18: #{graph_similarity_forward.1} parent=1 // pred_check
      _
    $region19: #{graph_similarity_forward.1} parent=1 // pred_check_branch
      %24 = sbr.rel (0) target = $region21
    $region20: #{graph_similarity_forward.1} parent=1 // pred_region
      _
    $region21: #{graph_similarity_forward.1} parent=1 // pred_fallthru
      _
    // Predicated region
    $region22: #{graph_similarity_forward.1} parent=1 // pred_check
      _
    $region23: #{graph_similarity_forward.1} parent=1 // pred_check_branch
      %26 = sbr.rel (0) target = $region25
    $region24: #{graph_similarity_forward.1} parent=1 // pred_region
      _
    $region25: #{graph_similarity_forward.1} parent=1 // pred_fallthru
      _
    // Predicated region
    $region26: #{graph_similarity_forward.1} parent=1 // pred_check
      _
    $region27: #{graph_similarity_forward.1} parent=1 // pred_check_branch
      %28 = sbr.rel (0) target = $region29
    $region28: #{graph_similarity_forward.1} parent=1 // pred_region
      _
    $region29: #{graph_similarity_forward.1} parent=1 // pred_fallthru
      _
    // Predicated region
    $region30: #{graph_similarity_forward.1} parent=1 // pred_check
      _
    $region31: #{graph_similarity_forward.1} parent=1 // pred_check_branch
      %30 = sbr.rel (0) target = $region33
    $region32: #{graph_similarity_forward.1} parent=1 // pred_region
      _
    $region33: #{graph_similarity_forward.1} parent=1 // pred_fallthru
      _
    // Predicated region
    $region34: #{graph_similarity_forward.1} parent=1 // pred_check
      _
    $region35: #{graph_similarity_forward.1} parent=1 // pred_check_branch
      %32 = sbr.rel (0) target = $region37
    $region36: #{graph_similarity_forward.1} parent=1 // pred_region
      _
    $region37: #{graph_similarity_forward.1} parent=1 // pred_fallthru
      _
    %v33 = vld [vmem:[%s0] sm:$0xff]
    %v34 = vld [vmem:[%s1] sm:$0xff]
    %v35 = vld [vmem:[%s2] sm:$0xff]
    %v36 = vld [vmem:[%s2 + $0x8] sm:$0xff]
    %v37 = vld [vmem:[%s2 + $0x10] sm:$0xff]
    %v38 = vld [vmem:[%s2 + $0x18] sm:$0xff]
    %v39 = vld [vmem:[%s3] sm:$0xff]
    %v40 = vld [vmem:[%s3 + $0x8] sm:$0xff]
    %v41 = vld [vmem:[%s3 + $0x10] sm:$0xff]
    %v42 = vld [vmem:[%s3 + $0x18] sm:$0xff]
    %vm43 = vcmask 261120
    %v45 = vsel %vm43, %v34, 0
    %47 = vmatpush.msra.mxu0 0.0
    %48 = vmatpush.msra.mxu0 0.0
    %49 = vmatpush.msra.mxu0 0.0
    %50 = vmatpush.msra.mxu0 0.0
    %51 = vmatpush.msra.mxu0 0.0
    %52 = vmatpush.msra.mxu0 0.0
    %53 = vmatpush.msra.mxu0 0.0
    %54 = vmatpush.msra.mxu0 0.0
    %55 = vmatpush.msra.mxu0 0.0
    %56 = vmatpush.msra.mxu0 0.0
    %57 = vmatpush.msra.mxu0 0.0
    %58 = vmatpush.msra.mxu0 0.0
    %59 = vmatpush.msra.mxu0 %v42
    %60 = vmatpush.msra.mxu0 %v41
    %61 = vmatpush.msra.mxu0 %v40
    %62 = vmatpush.msra.mxu0 %v39
    %63 = vmatmul.f32.gmra.mxu0 %v45
    %v64 = vpop.f32.mrf.mxu0
    %v65 = vadd.f32 0.0, %v64
    %66 = vdwg.mxu0
    %v68 = vsel %vm43, %v33, 0
    %70 = vmatpush.msra.mxu0 0.0
    %71 = vmatpush.msra.mxu0 0.0
    %72 = vmatpush.msra.mxu0 0.0
    %73 = vmatpush.msra.mxu0 0.0
    %74 = vmatpush.msra.mxu0 0.0
    %75 = vmatpush.msra.mxu0 0.0
    %76 = vmatpush.msra.mxu0 0.0
    %77 = vmatpush.msra.mxu0 0.0
    %78 = vmatpush.msra.mxu0 0.0
    %79 = vmatpush.msra.mxu0 0.0
    %80 = vmatpush.msra.mxu0 0.0
    %81 = vmatpush.msra.mxu0 0.0
    %82 = vmatpush.msra.mxu0 %v38
    %83 = vmatpush.msra.mxu0 %v37
    %84 = vmatpush.msra.mxu0 %v36
    %85 = vmatpush.msra.mxu0 %v35
    %86 = vmatmul.f32.gmra.mxu0 %v68
    %v87 = vpop.f32.mrf.mxu0
    %v88 = vadd.f32 %v65, %v87
    %89 = vdwg.mxu0
    %v90 = vld [vmem:[%s4] sm:$0x1]
    %v92 = vperm.slane %v90, 0
    %v94 = vadd.f32 %v88, %v92
    %v95 = vmax.f32 %v94, 0.0
    %v96 = vld [vmem:[%s5] sm:$0x7f]
    %v97 = vld [vmem:[%s6] sm:$0x1]
    %v99 = vperm.slane %v97, 0
    %vm101 = vcmask 56320
    %v103 = vsel %vm101, %v95, 0
    %vm105 = vcmask 1046528
    %v107 = vsel %vm105, %v96, 0
    %109 = vmatpush.msra.mxu0 0.0
    %110 = vmatpush.msra.mxu0 0.0
    %111 = vmatpush.msra.mxu0 0.0
    %112 = vmatpush.msra.mxu0 0.0
    %113 = vmatpush.msra.mxu0 0.0
    %114 = vmatpush.msra.mxu0 0.0
    %115 = vmatpush.msra.mxu0 0.0
    %116 = vmatpush.msra.mxu0 0.0
    %117 = vmatpush.msra.mxu0 0.0
    %118 = vmatpush.msra.mxu0 0.0
    %119 = vmatpush.msra.mxu0 0.0
    %120 = vmatpush.msra.mxu0 0.0
    %121 = vmatpush.msra.mxu0 0.0
    %122 = vmatpush.msra.mxu0 0.0
    %123 = vmatpush.msra.mxu0 0.0
    %124 = vmatpush.msra.mxu0 %v107
    %125 = vmatmul.f32.gmra.mxu0 %v103
    %v126 = vpop.f32.mrf.mxu0
    %v127 = vadd.f32 %v99, %v126
    %128 = vdwg.mxu0
    %v129 = vmax.f32 %v127, 0.0
    %v130 = vld [vmem:[%s7] sm:$0x7f]
    %v131 = vld [vmem:[%s8] sm:$0x1]
    %v133 = vperm.slane %v131, 0
    %v136 = vsel %vm101, %v129, 0
    %v139 = vsel %vm105, %v130, 0
    %141 = vmatpush.msra.mxu0 0.0
    %142 = vmatpush.msra.mxu0 0.0
    %143 = vmatpush.msra.mxu0 0.0
    %144 = vmatpush.msra.mxu0 0.0
    %145 = vmatpush.msra.mxu0 0.0
    %146 = vmatpush.msra.mxu0 0.0
    %147 = vmatpush.msra.mxu0 0.0
    %148 = vmatpush.msra.mxu0 0.0
    %149 = vmatpush.msra.mxu0 0.0
    %150 = vmatpush.msra.mxu0 0.0
    %151 = vmatpush.msra.mxu0 0.0
    %152 = vmatpush.msra.mxu0 0.0
    %153 = vmatpush.msra.mxu0 0.0
    %154 = vmatpush.msra.mxu0 0.0
    %155 = vmatpush.msra.mxu0 0.0
    %156 = vmatpush.msra.mxu0 %v139
    %157 = vmatmul.f32.gmra.mxu0 %v136
    %v158 = vpop.f32.mrf.mxu0
    %v159 = vadd.f32 %v133, %v158
    %160 = vdwg.mxu0
    %v161 = vsub.f32 0.0, %v159
    %v162 = vmul.f32 %v161, 1.442695
    %v163 = vpow.pop %v162
    %v164 = vadd.f32 %v163, 1.0
    %v165 = vrcp.pop %v164
    %vm166 = vcmask 97280
    %167 = vst.msk [vmem:[#allocation2] sm:$0xff] %vm166, %v165
    // Predicated region
    $region38: #{graph_similarity_forward.1} parent=1 // pred_check
      _
    $region39: #{graph_similarity_forward.1} parent=1 // pred_check_branch
      %169 = sbr.rel (0) target = $region41
    $region40: #{graph_similarity_forward.1} parent=1 // pred_region
      %171 = vsyncadd [#allocation3], 0
      %s173 = sshll.u32 [#allocation2], 4
      %s174 = int_to_ptr.vmem [resolvable:$true] %s173
      %s175 = sshll.u32 %s9, 4
      %s176 = int_to_ptr.hbm [resolvable:$true] %s175
      %178 = dma.vmem_to_hbm [thread:$0]  %s174, 128, %s176, [#allocation3]
    $region41: #{graph_similarity_forward.1} parent=1 // pred_fallthru
      _
    // Predicated region
    $region42: #{graph_similarity_forward.1} parent=1 // pred_check
      _
    $region43: #{graph_similarity_forward.1} parent=1 // pred_check_branch
      %180 = sbr.rel (0) target = $region45
    $region44: #{graph_similarity_forward.1} parent=1 // pred_region
      %182 = dma.done [#allocation3], 128
    $region45: #{graph_similarity_forward.1} parent=1 // pred_fallthru
      _
    %183 = vsyncpa [#allocation3], 1

</llo_original>
